<compile_context>
chip_gen: v5e
topology: v5e:2x2
jax: 0.10.0
libtpu: 0.0.40
codegen_flags: <defaults>
</compile_context>

<pallas_src>
import jax
import jax.numpy as jnp
from jax.experimental import pallas as pl
from jax.experimental.pallas import tpu as pltpu

EPS = 1e-5


def add_and_norm_kernel(alpha_ref, bias_ref, x_ref, sub_ref, o_ref):
    # alpha_ref, bias_ref: (1,) scalars in SMEM
    # x_ref, sub_ref, o_ref: (TR, D) tiles in VMEM
    #
    # Hoist scalar reads once (JAX does not CSE broadcast_in_dim).
    alpha = alpha_ref[0]
    bias = bias_ref[0]

    # Residual add; upcast to f32 so the reduction stays accurate for bf16 inputs.
    s = x_ref[...].astype(jnp.float32) + sub_ref[...].astype(jnp.float32)
    d = s.shape[-1]

    # Two-pass statistics (numerically stable; the kernel is HBM-bound anyway, compute
    # hides under DMA).  Stats are strictly per-row, which is what makes the ragged
    # last grid block safe (garbage OOB rows never touch valid rows).
    mean = jnp.mean(s, axis=-1, keepdims=True)
    centered = s - mean
    # torch std: unbiased (ddof=1)
    var = jnp.sum(centered * centered, axis=-1, keepdims=True) / (d - 1)
    std = jnp.sqrt(var)

    # Fold alpha into the per-row (TR, 1) scale: removes a full (TR, D) VPU multiply.
    # Exact reciprocal (non-approx) kept: it is only a (TR, 1) vector, off the byte path.
    inv = pl.reciprocal(std + EPS)
    scale = alpha * inv
    o_ref[...] = (centered * scale + bias).astype(o_ref.dtype)


def _vmem_capacity_bytes():
    """Physical VMEM per TensorCore; conservative (v7x) fallback if query fails."""
    try:
        return int(pltpu.get_tpu_info().vmem_capacity_bytes)
    except Exception:
        return 64 << 20  # v7x-safe default


def add_and_norm(x, sublayer_x, alpha, bias, *, row_tile=2048):
    """x, sublayer_x: (B, S, D).  alpha, bias: (1,) float32 params.

    row_tile is a request; it is clamped so the per-grid-step VMEM working set
    (3 tensors x 2 pipeline buffers x itemsize  +  ~3 f32 full-tile intermediates)
    fits a budget of ~half the physical VMEM of the current TPU generation.
    Non-divisible row counts are handled by a ragged grid (no host-side padding).
    """
    B, S, D = x.shape
    rows = B * S
    itemsize = jnp.dtype(x.dtype).itemsize

    # Sublane packing: 8 rows/vreg for 32-bit dtypes, 16 for 16-bit (bf16) dtypes.
    row_align = 8 if itemsize >= 4 else 16

    # Generation-specific budgets.
    vmem_cap = _vmem_capacity_bytes()
    tile_budget_bytes = vmem_cap // 2            # 64 MiB on v5e/v6e, 32 MiB on v7x
    vmem_limit_bytes = (vmem_cap * 3) // 4       # 96 MiB on v5e/v6e, 48 MiB on v7x

    # Bytes per row of tile:
    #   3 arrays (x, sub, out) x 2 pipeline buffers x itemsize      = 6*itemsize per elem
    #   f32 intermediates (s, centered, pre-cast store temp) ~ 3x4  = 12 per elem
    bytes_per_row = D * (6 * itemsize + 12)
    max_rows_by_vmem = max(row_align, tile_budget_bytes // bytes_per_row)

    tr = min(row_tile, max_rows_by_vmem, max(rows, row_align))
    tr = max(row_align, (tr // row_align) * row_align)

    x2 = x.reshape(rows, D)
    s2 = sublayer_x.reshape(rows, D)

    # Ragged grid: no jnp.pad of the inputs and no output slice.  Pallas clips OOB
    # output writes; OOB input rows are garbage but stats are per-row, so valid rows
    # are unaffected (do NOT add any cross-row reduction without re-adding masking).
    grid = (pl.cdiv(rows, tr),)

    out = pl.pallas_call(
        add_and_norm_kernel,
        out_shape=jax.ShapeDtypeStruct((rows, D), x.dtype),
        grid=grid,
        in_specs=[
            pl.BlockSpec(memory_space=pltpu.MemorySpace.SMEM),   # alpha
            pl.BlockSpec(memory_space=pltpu.MemorySpace.SMEM),   # bias
            pl.BlockSpec((tr, D), lambda i: (i, 0)),             # x tile
            pl.BlockSpec((tr, D), lambda i: (i, 0)),             # sublayer tile
        ],
        out_specs=pl.BlockSpec((tr, D), lambda i: (i, 0)),
        compiler_params=pltpu.CompilerParams(
            # Row axis is fully parallel -> shards across v7x's 2 TensorCores;
            # harmless no-op on single-TC v5e/v6e.
            dimension_semantics=("parallel",),
            # Explicit scoped-VMEM limit: above the 16/32 MiB defaults, below physical.
            vmem_limit_bytes=int(vmem_limit_bytes),
        ),
    )(alpha, bias, x2, s2)

    return out.reshape(B, S, D)


def reference(x, sublayer_x, alpha, bias):
    s = (x + sublayer_x).astype(jnp.float32)
    mean = jnp.mean(s, axis=-1, keepdims=True)
    var = jnp.sum((s - mean) ** 2, axis=-1, keepdims=True) / (s.shape[-1] - 1)
    std = jnp.sqrt(var)
    return ((s - mean) / (std + EPS) * alpha[0] + bias[0]).astype(x.dtype)


if __name__ == "__main__":
    key = jax.random.PRNGKey(0)
    k1, k2 = jax.random.split(key)
    B, S, D = 2, 8, 32
    x = jax.random.normal(k1, (B, S, D), dtype=jnp.float32)
    sublayer_x = jax.random.normal(k2, (B, S, D), dtype=jnp.float32)

    # deterministic parameter init, matching nn.Parameter(torch.ones(1)/zeros(1))
    alpha = jnp.ones((1,), dtype=jnp.float32)
    bias = jnp.zeros((1,), dtype=jnp.float32)

    out = add_and_norm(x, sublayer_x, alpha, bias)
    out = jax.block_until_ready(out)

    ref = reference(x, sublayer_x, alpha, bias)
    assert jnp.allclose(out, ref, atol=1e-5, rtol=1e-5), "mismatch vs reference"

    # Also exercise the ragged-grid path (rows not divisible by the tile) at a larger,
    # lane-dense hidden size (D multiple of 128 -> unmasked stores).
    B2, S2, D2 = 3, 37, 256
    xb = jax.random.normal(k1, (B2, S2, D2), dtype=jnp.float32)
    sb = jax.random.normal(k2, (B2, S2, D2), dtype=jnp.float32)
    out2 = jax.block_until_ready(add_and_norm(xb, sb, alpha, bias))
    ref2 = reference(xb, sb, alpha, bias)
    assert jnp.allclose(out2, ref2, atol=1e-5, rtol=1e-5), "mismatch vs reference (ragged)"

    # bf16 inputs (exercises the f32-intermediate-aware VMEM accounting path).
    xb16 = xb.astype(jnp.bfloat16)
    sb16 = sb.astype(jnp.bfloat16)
    out3 = jax.block_until_ready(add_and_norm(xb16, sb16, alpha, bias))
    ref3 = reference(xb16, sb16, alpha, bias)
    assert jnp.allclose(out3.astype(jnp.float32), ref3.astype(jnp.float32),
                        atol=2e-2, rtol=2e-2), "mismatch vs reference (bf16)"

    print("KERNEL_OK")
</pallas_src>

<mosaic_0001>
module attributes {stable_mosaic.version = 11 : i64} {
  func.func @add_and_norm_kernel(%arg0: i32, %arg1: memref<1xf32, #tpu.memory_space<smem>>, %arg2: memref<1xf32, #tpu.memory_space<smem>>, %arg3: memref<16x32xf32, #tpu.memory_space<vmem>>, %arg4: memref<16x32xf32, #tpu.memory_space<vmem>>, %arg5: memref<16x32xf32, #tpu.memory_space<vmem>>) attributes {dimension_semantics = [#tpu.dimension_semantics<parallel>], iteration_bounds = array<i64: 1>, scalar_prefetch = 0 : i64, scratch_operands = 0 : i64, tpu.core_type = #tpu.core_type<tc>, window_params = [{transform_indices = @transform_0, window_bounds = array<i64: 1>}, {transform_indices = @transform_1, window_bounds = array<i64: 1>}, {transform_indices = @transform_2, window_bounds = array<i64: 16, 32>}, {transform_indices = @transform_3, window_bounds = array<i64: 16, 32>}, {transform_indices = @transform_4, window_bounds = array<i64: 16, 32>}]} {
    %c0 = arith.constant 0 : index
    %0 = memref.load %arg1[%c0] : memref<1xf32, #tpu.memory_space<smem>>
    %c0_0 = arith.constant 0 : index
    %1 = memref.load %arg2[%c0_0] : memref<1xf32, #tpu.memory_space<smem>>
    %c0_1 = arith.constant 0 : index
    %c0_2 = arith.constant 0 : index
    %2 = vector.load %arg3[%c0_1, %c0_2] : memref<16x32xf32, #tpu.memory_space<vmem>>, vector<16x32xf32>
    %c0_3 = arith.constant 0 : index
    %c0_4 = arith.constant 0 : index
    %3 = vector.load %arg4[%c0_3, %c0_4] : memref<16x32xf32, #tpu.memory_space<vmem>>, vector<16x32xf32>
    %4 = arith.addf %2, %3 : vector<16x32xf32>
    %cst = arith.constant dense<0.000000e+00> : vector<16xf32>
    %5 = vector.multi_reduction <add>, %4, %cst [1] : vector<16x32xf32> to vector<16xf32>
    %6 = vector.shape_cast %5 : vector<16xf32> to vector<16x1xf32>
    %cst_5 = arith.constant 3.200000e+01 : f32
    %7 = vector.broadcast %cst_5 : f32 to vector<16x1xf32>
    %8 = arith.divf %6, %7 : vector<16x1xf32>
    %9 = vector.broadcast %8 : vector<16x1xf32> to vector<16x32xf32>
    %10 = arith.subf %4, %9 : vector<16x32xf32>
    %11 = arith.mulf %10, %10 : vector<16x32xf32>
    %cst_6 = arith.constant dense<0.000000e+00> : vector<16xf32>
    %12 = vector.multi_reduction <add>, %11, %cst_6 [1] : vector<16x32xf32> to vector<16xf32>
    %13 = vector.shape_cast %12 : vector<16xf32> to vector<16x1xf32>
    %cst_7 = arith.constant 3.100000e+01 : f32
    %14 = vector.broadcast %cst_7 : f32 to vector<16x1xf32>
    %15 = arith.divf %13, %14 : vector<16x1xf32>
    %16 = math.sqrt %15 : vector<16x1xf32>
    %cst_8 = arith.constant 9.99999974E-6 : f32
    %17 = vector.broadcast %cst_8 : f32 to vector<16x1xf32>
    %18 = arith.addf %16, %17 : vector<16x1xf32>
    %19 = tpu.reciprocal %18 : vector<16x1xf32> -> vector<16x1xf32>
    %20 = vector.broadcast %0 : f32 to vector<16x1xf32>
    %21 = arith.mulf %20, %19 : vector<16x1xf32>
    %22 = vector.broadcast %21 : vector<16x1xf32> to vector<16x32xf32>
    %23 = arith.mulf %10, %22 : vector<16x32xf32>
    %24 = vector.broadcast %1 : f32 to vector<16x32xf32>
    %25 = arith.addf %23, %24 : vector<16x32xf32>
    %c0_9 = arith.constant 0 : index
    %c0_10 = arith.constant 0 : index
    %26 = vector.load %arg5[%c0_9, %c0_10] : memref<16x32xf32, #tpu.memory_space<vmem>>, vector<16x32xf32>
    tpu.vector_store %arg5[%c0_9, %c0_10], %25 {strides = array<i32>} : memref<16x32xf32, #tpu.memory_space<vmem>>, vector<16x32xf32>,
    return
  }
  func.func @transform_0(%arg0: i32) -> i32 {
    %c0_i32 = arith.constant 0 : i32
    %c0_i32_0 = arith.constant 0 : i32
    return %c0_i32 : i32
  }
  func.func @transform_1(%arg0: i32) -> i32 {
    %c0_i32 = arith.constant 0 : i32
    %c0_i32_0 = arith.constant 0 : i32
    return %c0_i32 : i32
  }
  func.func @transform_2(%arg0: i32) -> (i32, i32) {
    %c0_i32 = arith.constant 0 : i32
    %c0_i32_0 = arith.constant 0 : i32
    return %arg0, %c0_i32 : i32, i32
  }
  func.func @transform_3(%arg0: i32) -> (i32, i32) {
    %c0_i32 = arith.constant 0 : i32
    %c0_i32_0 = arith.constant 0 : i32
    return %arg0, %c0_i32 : i32, i32
  }
  func.func @transform_4(%arg0: i32) -> (i32, i32) {
    %c0_i32 = arith.constant 0 : i32
    %c0_i32_0 = arith.constant 0 : i32
    return %arg0, %c0_i32 : i32, i32
  }
}

</mosaic_0001>

<llo_original>
// kernel: tpu_custom_call.1
$region0: #{tpu_custom_call.1}
  #allocation0 [shape = 'u32[]', space=smem, size = 0x4, offset = 0x4, fixed_abs, tag = 'smem constant byte address 0x4 - core index']
  #allocation1 [shape = 'u32[72,128]{1,0:T(1,128)}', space=vmem, size = 0x9000, scoped, tag = 'internal scratch']
  #allocation2 [shape = 'f32[1]{0:T(128)S(6)}', space=smem, size = 0x200, scoped, tag = 'scoped memory for tpu_custom_call.1']
  #allocation3 [shape = 'f32[1]{0:T(128)S(6)}', space=smem, size = 0x200, scoped, tag = 'scoped memory for tpu_custom_call.1']
  %s0 = inlined_call_operand.<no memory space> [shape: f32[1], index: 0, kind: input, shape index: {}]
  %s1 = inlined_call_operand.<no memory space> [shape: f32[1], index: 1, kind: input, shape index: {}]
  %s2 = inlined_call_operand.hbm [shape: f32[16,32], index: 2, kind: input, shape index: {}]
  %s3 = inlined_call_operand.hbm [shape: f32[16,32], index: 3, kind: input, shape index: {}]
  %s4 = inlined_call_operand.hbm [shape: f32[16,32], index: 4, kind: output, shape index: {}]
  %s5 = sld [smem:[#allocation0]]
  $region34: #{tpu_custom_call.1} parent=0
    _
  %s7 = ssub.s32 1, %s5
  %s8 = scalar_select 0, %s7, %s5
  %9 = sst [smem:[#allocation2]] %s0
  %10 = sst [smem:[#allocation3]] %s1
  $region1: #{tpu_custom_call.1} parent=0
    #allocation4 [shape = 'u8[8192]{0}', space=vmem, size = 0x2000, scoped, tag = 'input window, operand 2, single buffered']
    #allocation5 [shape = 's32[1]{0}', space=sflag, size = 0x4, scoped, tag = 'scoped memory for tpu_custom_call.1']
    #allocation6 [shape = 's32[1]{0}', space=sflag, size = 0x4, scoped, tag = 'scoped memory for tpu_custom_call.1']
    #allocation7 [shape = 'u8[8192]{0}', space=vmem, size = 0x2000, scoped, tag = 'input window, operand 3, single buffered']
    #allocation8 [shape = 's32[1]{0}', space=sflag, size = 0x4, scoped, tag = 'scoped memory for tpu_custom_call.1']
    #allocation9 [shape = 'u8[8192]{0}', space=vmem, size = 0x2000, scoped, tag = 'output window, operand 0, single buffered']
    %11 = vsyncpa [#allocation5], 0
    %12 = vsyncpa [#allocation8], 0
    %13 = vsyncpa [#allocation6], 0
    // Predicated region
    $region2: #{tpu_custom_call.1} parent=1 // pred_check
      _
    $region3: #{tpu_custom_call.1} parent=1 // pred_check_branch
      %15 = sbr.rel (0) target = $region5
    $region4: #{tpu_custom_call.1} parent=1 // pred_region
      _
    $region5: #{tpu_custom_call.1} parent=1 // pred_fallthru
      _
    // Predicated region
    $region6: #{tpu_custom_call.1} parent=1 // pred_check
      _
    $region7: #{tpu_custom_call.1} parent=1 // pred_check_branch
      %17 = sbr.rel (0) target = $region9
    $region8: #{tpu_custom_call.1} parent=1 // pred_region
      _
    $region9: #{tpu_custom_call.1} parent=1 // pred_fallthru
      _
    // Predicated region
    $region10: #{tpu_custom_call.1} parent=1 // pred_check
      _
    $region11: #{tpu_custom_call.1} parent=1 // pred_check_branch
      %19 = sbr.rel (0) target = $region13
    $region12: #{tpu_custom_call.1} parent=1 // pred_region
      %21 = vsyncadd [#allocation5], 0
      %s22 = sshll.u32 %s2, 4
      %s23 = int_to_ptr.hbm [resolvable:$true] %s22
      %s24 = sshll.u32 [#allocation4], 4
      %s25 = int_to_ptr.vmem [resolvable:$true] %s24
      %30 = dma.hbm_to_vmem [thread:$0]  %s23, 256, %s25, [#allocation5], 128, 128, 8
    $region13: #{tpu_custom_call.1} parent=1 // pred_fallthru
      _
    // Predicated region
    $region14: #{tpu_custom_call.1} parent=1 // pred_check
      _
    $region15: #{tpu_custom_call.1} parent=1 // pred_check_branch
      %32 = sbr.rel (0) target = $region17
    $region16: #{tpu_custom_call.1} parent=1 // pred_region
      %34 = vsyncadd [#allocation8], 0
      %s35 = sshll.u32 %s3, 4
      %s36 = int_to_ptr.hbm [resolvable:$true] %s35
      %s37 = sshll.u32 [#allocation7], 4
      %s38 = int_to_ptr.vmem [resolvable:$true] %s37
      %43 = dma.hbm_to_vmem [thread:$0]  %s36, 256, %s38, [#allocation8], 128, 128, 8
    $region17: #{tpu_custom_call.1} parent=1 // pred_fallthru
      _
    // Predicated region
    $region18: #{tpu_custom_call.1} parent=1 // pred_check
      _
    $region19: #{tpu_custom_call.1} parent=1 // pred_check_branch
      %45 = sbr.rel (0) target = $region21
    $region20: #{tpu_custom_call.1} parent=1 // pred_region
      %47 = dma.done [#allocation5], 256
    $region21: #{tpu_custom_call.1} parent=1 // pred_fallthru
      _
    // Predicated region
    $region22: #{tpu_custom_call.1} parent=1 // pred_check
      _
    $region23: #{tpu_custom_call.1} parent=1 // pred_check_branch
      %49 = sbr.rel (0) target = $region25
    $region24: #{tpu_custom_call.1} parent=1 // pred_region
      %51 = dma.done [#allocation8], 256
    $region25: #{tpu_custom_call.1} parent=1 // pred_fallthru
      _
    %s52 = sld [smem:[#allocation2]]
    %s53 = sld [smem:[#allocation3]]
    %v54 = vld [vmem:[#allocation4] sm:$0xff]
    %v55 = vld [vmem:[#allocation4 + $0x8] sm:$0xff]
    %v56 = vld [vmem:[#allocation7] sm:$0xff]
    %v57 = vld [vmem:[#allocation7 + $0x8] sm:$0xff]
    %v58 = vadd.f32 %v54, %v56
    %v59 = vadd.f32 %v55, %v57
    %vm60 = vcmask 261120
    %v61 = vsel %vm60, %v58, 0.0
    %62 = vadd.xlane.f32.xlu0 %v61
    %v63 = vpop.xlane.xlu0 %62
    %v64 = vsel %vm60, %v59, 0.0
    %65 = vadd.xlane.f32.xlu0 %v64
    %v66 = vpop.xlane.xlu0 %65
    %v67 = vrcp.pop 32.0
    %v68 = vmul.f32 32.0, %v67
    %v69 = vsub.f32 1.0, %v68
    %v70 = vmul.f32 %v67, %v69
    %v71 = vadd.f32 %v67, %v70
    %vm72 = vweird.f32 %v67
    %v73 = vsel %vm72, %v67, %v71
    %v74 = vmul.f32 %v63, %v73
    %v75 = vmul.f32 %v66, %v73
    %v76 = vsub.f32 %v58, %v74
    %v77 = vsub.f32 %v59, %v75
    %v78 = vmul.f32 %v76, %v76
    %v79 = vmul.f32 %v77, %v77
    %v80 = vsel %vm60, %v78, 0.0
    %81 = vadd.xlane.f32.xlu0 %v80
    %v82 = vpop.xlane.xlu0 %81
    %v83 = vsel %vm60, %v79, 0.0
    %84 = vadd.xlane.f32.xlu0 %v83
    %v85 = vpop.xlane.xlu0 %84
    %v86 = vrcp.pop 31.0
    %v87 = vmul.f32 31.0, %v86
    %v88 = vsub.f32 1.0, %v87
    %v89 = vmul.f32 %v86, %v88
    %v90 = vadd.f32 %v86, %v89
    %vm91 = vweird.f32 %v86
    %v92 = vsel %vm91, %v86, %v90
    %v93 = vmul.f32 %v82, %v92
    %v94 = vmul.f32 %v85, %v92
    %v95 = vrsqrt.pop %v93
    %v96 = vmul.f32 %v95, %v93
    %v97 = vmul.f32 %v96, %v95
    %v98 = vmul.f32 0.5, %v97
    %v99 = vsub.f32 1.5, %v98
    %v100 = vmul.f32 %v95, %v99
    %v101 = vmul.f32 %v93, %v100
    %vm102 = vcmp.eq.f32.partialorder %v93, inf
    %v103 = vsel %vm102, %v93, %v101
    %vm104 = vcmp.eq.f32.partialorder %v93, 0.0
    %v105 = vand.u32 %v93, 2147483648
    %v106 = vsel %vm104, %v105, %v103
    %v107 = vrsqrt.pop %v94
    %v108 = vmul.f32 %v107, %v94
    %v109 = vmul.f32 %v108, %v107
    %v110 = vmul.f32 0.5, %v109
    %v111 = vsub.f32 1.5, %v110
    %v112 = vmul.f32 %v107, %v111
    %v113 = vmul.f32 %v94, %v112
    %vm114 = vcmp.eq.f32.partialorder %v94, inf
    %v115 = vsel %vm114, %v94, %v113
    %vm116 = vcmp.eq.f32.partialorder %v94, 0.0
    %v117 = vand.u32 %v94, 2147483648
    %v118 = vsel %vm116, %v117, %v115
    %v119 = vadd.f32 %v106, 1e-05
    %v120 = vadd.f32 %v118, 1e-05
    %v121 = vrcp.pop %v119
    %v122 = vmul.f32 %v119, %v121
    %v123 = vsub.f32 1.0, %v122
    %v124 = vmul.f32 %v121, %v123
    %v125 = vadd.f32 %v121, %v124
    %vm126 = vweird.f32 %v119
    %vm127 = vweird.f32 %v121
    %vm128 = vmor %vm126, %vm127
    %v129 = vsel %vm128, %v121, %v125
    %v130 = vand.u32 2147483647, %v119
    %vm131 = vcmp.eq.f32.partialorder %v130, 8.507059e+37
    %v132 = vand.u32 %v119, 2147483648
    %v133 = vor.u32 1.1754944e-38, %v132
    %v134 = vsel %vm131, %v133, %v129
    %v135 = vrcp.pop %v120
    %v136 = vmul.f32 %v120, %v135
    %v137 = vsub.f32 1.0, %v136
    %v138 = vmul.f32 %v135, %v137
    %v139 = vadd.f32 %v135, %v138
    %vm140 = vweird.f32 %v120
    %vm141 = vweird.f32 %v135
    %vm142 = vmor %vm140, %vm141
    %v143 = vsel %vm142, %v135, %v139
    %v144 = vand.u32 2147483647, %v120
    %vm145 = vcmp.eq.f32.partialorder %v144, 8.507059e+37
    %v146 = vand.u32 %v120, 2147483648
    %v147 = vor.u32 1.1754944e-38, %v146
    %v148 = vsel %vm145, %v147, %v143
    %v149 = vstv %s52
    %v150 = vmul.f32 %v149, %v134
    %v151 = vmul.f32 %v149, %v148
    %v152 = vmul.f32 %v76, %v150
    %v153 = vmul.f32 %v77, %v151
    %v154 = vstv %s53
    %v155 = vadd.f32 %v152, %v154
    %v156 = vadd.f32 %v153, %v154
    %157 = vst.msk [vmem:[#allocation9] sm:$0xff] %vm60, %v155
    %158 = vst.msk [vmem:[#allocation9 + $0x8] sm:$0xff] %vm60, %v156
    // Predicated region
    $region26: #{tpu_custom_call.1} parent=1 // pred_check
      _
    $region27: #{tpu_custom_call.1} parent=1 // pred_check_branch
      %160 = sbr.rel (0) target = $region29
    $region28: #{tpu_custom_call.1} parent=1 // pred_region
      %162 = vsyncadd [#allocation6], 0
      %s163 = sshll.u32 [#allocation9], 4
      %s164 = int_to_ptr.vmem [resolvable:$true] %s163
      %s165 = sshll.u32 %s4, 4
      %s166 = int_to_ptr.hbm [resolvable:$true] %s165
      %171 = dma.vmem_to_hbm [thread:$0]  %s164, 256, %s166, [#allocation6], 128, 128, 8
    $region29: #{tpu_custom_call.1} parent=1 // pred_fallthru
      _
    // Predicated region
    $region30: #{tpu_custom_call.1} parent=1 // pred_check
      _
    $region31: #{tpu_custom_call.1} parent=1 // pred_check_branch
      %173 = sbr.rel (0) target = $region33
    $region32: #{tpu_custom_call.1} parent=1 // pred_region
      %175 = dma.done [#allocation6], 256
    $region33: #{tpu_custom_call.1} parent=1 // pred_fallthru
      _
    %176 = vsyncpa [#allocation5], 1
    %177 = vsyncpa [#allocation8], 1
    %178 = vsyncpa [#allocation6], 1

</llo_original>
